<compile_context>
chip_gen: v7x
topology: tpu7x:2x2x1
jax: 0.10.0
libtpu: 0.0.40
codegen_flags: <defaults>
</compile_context>

<pallas_src>
import jax
import jax.numpy as jnp
from jax.experimental import pallas as pl
from jax.experimental.pallas import tpu as pltpu

MIN_VAL = 0.2
MAX_VAL = 0.5

# ~4 MiB per block. 3 arrays x 2 pipeline buffers = ~24 MiB of VMEM.
_TARGET_BLOCK_BYTES = 4 * 1024 * 1024
# Explicit scoped-VMEM limit: removes the v5e 16 MiB-default cliff, leaves
# headroom on v7x's 64 MiB physical VMEM, trivially fits v6e.
_VMEM_LIMIT_BYTES = 40 * 1024 * 1024

# Rows per sublane tile by dtype itemsize (f32 -> 8, bf16 -> 16, int8/fp8 -> 32).
_SUBLANE_PACK = {4: 8, 2: 16, 1: 32}


def hardtanh_backward_kernel(grad_out_ref, input_ref, out_ref):
    g = grad_out_ref[...]
    x = input_ref[...]
    # Strict inequalities: gradient is zeroed at the clamp boundaries too,
    # matching aten.hardtanh_backward.
    mask = jnp.logical_and(x > MIN_VAL, x < MAX_VAL)
    out_ref[...] = jnp.where(mask, g, jnp.zeros_like(g))


def hardtanh_backward(grad_out, inp, *, tile_r=None, tile_c=None,
                      donate_grad_out=False):
    assert grad_out.shape == inp.shape
    assert grad_out.dtype == inp.dtype
    orig_shape = grad_out.shape
    assert len(orig_shape) == 2, "module spec is a rank-2 tensor"
    R, C = orig_shape
    itemsize = jnp.dtype(grad_out.dtype).itemsize
    sublane = _SUBLANE_PACK.get(itemsize, 8)

    # Lane-dense re-view: the op is purely elementwise, so whenever the column
    # dim is narrow or not a multiple of 128 we are free to view the flat data
    # as a wider matrix (last dim a large multiple of 128 -> unmasked
    # full-width vector stores, no wasted lanes, fewer grid steps).
    if C % 128 != 0 or C < 512:
        n = R * C
        for wide in (8192, 4096, 2048, 1024, 512, 256, 128):
            if n % wide == 0:
                grad_out = grad_out.reshape(n // wide, wide)
                inp = inp.reshape(n // wide, wide)
                R, C = n // wide, wide
                break
        # If no multiple-of-128 divisor exists, fall through: full-extent
        # column blocks + Pallas edge masking still handle it correctly.

    # Tile selection: prefer full-width (fully contiguous in HBM) blocks of
    # roughly _TARGET_BLOCK_BYTES; only split columns for extremely wide
    # matrices. Ragged remainders are handled by pl.cdiv + Pallas edge
    # masking -- never fall back to a whole-dimension block on the row axis.
    if tile_c is None:
        max_full_width_c = _TARGET_BLOCK_BYTES // (sublane * itemsize)
        if C <= max_full_width_c:
            tile_c = C
        else:
            tile_c = max(128, (max_full_width_c // 128) * 128)
    if tile_r is None:
        rows_budget = max(
            sublane,
            (_TARGET_BLOCK_BYTES // (tile_c * itemsize)) // sublane * sublane,
        )
        tile_r = min(R, rows_budget)

    if tile_c >= C:
        # Full-width blocks -> 1-D grid (half the grid-step bookkeeping).
        tile_c = C
        grid = (pl.cdiv(R, tile_r),)
        spec = pl.BlockSpec((tile_r, tile_c), lambda i: (i, 0))
        dims = ("parallel",)
    else:
        grid = (pl.cdiv(R, tile_r), pl.cdiv(C, tile_c))
        spec = pl.BlockSpec((tile_r, tile_c), lambda i, j: (i, j))
        dims = ("parallel", "parallel")

    out = pl.pallas_call(
        hardtanh_backward_kernel,
        out_shape=jax.ShapeDtypeStruct((R, C), grad_out.dtype),
        grid_spec=pltpu.PrefetchScalarGridSpec(
            num_scalar_prefetch=0,
            grid=grid,
            in_specs=[spec, spec],
            out_specs=spec,
        ),
        compiler_params=pltpu.CompilerParams(
            # 'parallel' lets Mosaic shard grid steps across the two
            # TensorCores on v7x; it is a no-op on single-TC chips.
            dimension_semantics=dims,
            vmem_limit_bytes=_VMEM_LIMIT_BYTES,
        ),
        cost_estimate=pl.CostEstimate(
            # ~4 VPU ops/element: 2 compares + and + select.
            flops=4 * R * C,
            transcendentals=0,
            bytes_accessed=3 * R * C * itemsize,
        ),
        input_output_aliases={0: 0} if donate_grad_out else {},
    )(grad_out, inp)

    return out.reshape(orig_shape)


def hardtanh_backward_ref(grad_out, inp):
    mask = jnp.logical_and(inp > MIN_VAL, inp < MAX_VAL)
    return jnp.where(mask, grad_out, 0.0)


if __name__ == "__main__":
    key = jax.random.PRNGKey(0)
    k1, k2, k3, k4, k5, k6 = jax.random.split(key, 6)

    # Small 2-D shapes consistent with the ([-1, -1], float32) annotations.
    R, C = 16, 256
    grad_out = jax.random.normal(k1, (R, C), dtype=jnp.float32)
    # Inputs spread over [0, 1) so both mask branches are exercised.
    inp = jax.random.uniform(k2, (R, C), dtype=jnp.float32)

    out = hardtanh_backward(grad_out, inp)
    jax.block_until_ready(out)

    expected = hardtanh_backward_ref(grad_out, inp)
    assert out.shape == expected.shape and out.dtype == expected.dtype
    assert jnp.array_equal(out, expected), "mismatch vs reference"

    # Ragged, non-(8,128)-aligned shape with no 128-divisor of the element
    # count: exercises the full-extent-tile fallback + edge masking.
    R2, C2 = 13, 200
    g2 = jax.random.normal(k3, (R2, C2), dtype=jnp.float32)
    x2 = jax.random.uniform(k4, (R2, C2), dtype=jnp.float32)
    out2 = hardtanh_backward(g2, x2)
    jax.block_until_ready(out2)
    assert jnp.array_equal(out2, hardtanh_backward_ref(g2, x2)), "ragged mismatch"

    # Multi-step 2-D grid path (explicit small tiles) to exercise tiling logic.
    R3, C3 = 256, 640
    g3 = jax.random.normal(k5, (R3, C3), dtype=jnp.float32)
    x3 = jax.random.uniform(k6, (R3, C3), dtype=jnp.float32)
    out3 = hardtanh_backward(g3, x3, tile_r=64, tile_c=128)
    jax.block_until_ready(out3)
    assert jnp.array_equal(out3, hardtanh_backward_ref(g3, x3)), "tiled mismatch"

    print("KERNEL_OK")
</pallas_src>

<mosaic_0001>
module attributes {stable_mosaic.version = 11 : i64} {
  func.func @hardtanh_backward_kernel(%arg0: i32, %arg1: memref<1x4096xf32, #tpu.memory_space<vmem>>, %arg2: memref<1x4096xf32, #tpu.memory_space<vmem>>, %arg3: memref<1x4096xf32, #tpu.memory_space<vmem>>) attributes {dimension_semantics = [#tpu.dimension_semantics<parallel>], iteration_bounds = array<i64: 1>, scalar_prefetch = 0 : i64, scratch_operands = 0 : i64, tpu.core_type = #tpu.core_type<tc>, window_params = [{transform_indices = @transform_0, window_bounds = array<i64: 1, 4096>}, {transform_indices = @transform_1, window_bounds = array<i64: 1, 4096>}, {transform_indices = @transform_2, window_bounds = array<i64: 1, 4096>}]} {
    %c0 = arith.constant 0 : index
    %c0_0 = arith.constant 0 : index
    %0 = vector.load %arg1[%c0, %c0_0] : memref<1x4096xf32, #tpu.memory_space<vmem>>, vector<1x4096xf32>
    %c0_1 = arith.constant 0 : index
    %c0_2 = arith.constant 0 : index
    %1 = vector.load %arg2[%c0_1, %c0_2] : memref<1x4096xf32, #tpu.memory_space<vmem>>, vector<1x4096xf32>
    %cst = arith.constant 2.000000e-01 : f32
    %2 = vector.broadcast %cst : f32 to vector<1x4096xf32>
    %3 = arith.cmpf ogt, %1, %2 : vector<1x4096xf32>
    %cst_3 = arith.constant 5.000000e-01 : f32
    %4 = vector.broadcast %cst_3 : f32 to vector<1x4096xf32>
    %5 = arith.cmpf olt, %1, %4 : vector<1x4096xf32>
    %6 = arith.andi %3, %5 : vector<1x4096xi1>
    %cst_4 = arith.constant 0.000000e+00 : f32
    %7 = vector.broadcast %cst_4 : f32 to vector<1x4096xf32>
    %8 = arith.select %6, %0, %7 : vector<1x4096xi1>, vector<1x4096xf32>
    %c0_5 = arith.constant 0 : index
    %c0_6 = arith.constant 0 : index
    %9 = vector.load %arg3[%c0_5, %c0_6] : memref<1x4096xf32, #tpu.memory_space<vmem>>, vector<1x4096xf32>
    tpu.vector_store %arg3[%c0_5, %c0_6], %8 {strides = array<i32>} : memref<1x4096xf32, #tpu.memory_space<vmem>>, vector<1x4096xf32>,
    return
  }
  func.func @transform_0(%arg0: i32) -> (i32, i32) {
    %c0_i32 = arith.constant 0 : i32
    %c0_i32_0 = arith.constant 0 : i32
    return %arg0, %c0_i32 : i32, i32
  }
  func.func @transform_1(%arg0: i32) -> (i32, i32) {
    %c0_i32 = arith.constant 0 : i32
    %c0_i32_0 = arith.constant 0 : i32
    return %arg0, %c0_i32 : i32, i32
  }
  func.func @transform_2(%arg0: i32) -> (i32, i32) {
    %c0_i32 = arith.constant 0 : i32
    %c0_i32_0 = arith.constant 0 : i32
    return %arg0, %c0_i32 : i32, i32
  }
}

</mosaic_0001>

<llo_original>
// kernel: tpu_custom_call.1
$region0: #{tpu_custom_call.1}
  #allocation0 [shape = 'u32[]', space=smem, size = 0x4, offset = 0x4, fixed_abs, tag = 'smem constant byte address 0x4 - core index']
  #allocation1 [shape = 'u32[144,128]{1,0:T(1,128)}', space=vmem, size = 0x12000, scoped, tag = 'internal scratch']
  %s0 = inlined_call_operand.hbm [shape: f32[1,4096], index: 0, kind: input, shape index: {}]
  %s1 = inlined_call_operand.hbm [shape: f32[1,4096], index: 1, kind: input, shape index: {}]
  %s2 = inlined_call_operand.hbm [shape: f32[1,4096], index: 2, kind: output, shape index: {}]
  %s3 = sld [smem:[#allocation0]]
  $region26: #{tpu_custom_call.1} parent=0
    _
  %s5 = ssub.s32 1, %s3
  %s6 = scalar_select 0, %s5, %s3
  $region1: #{tpu_custom_call.1} parent=0
    #allocation2 [shape = 'u8[16384]{0}', space=vmem, size = 0x4000, scoped, tag = 'input window, operand 0, single buffered']
    #allocation3 [shape = 's32[1]{0}', space=sflag, size = 0x4, scoped, tag = 'scoped memory for tpu_custom_call.1']
    #allocation4 [shape = 's32[1]{0}', space=sflag, size = 0x4, scoped, tag = 'scoped memory for tpu_custom_call.1']
    #allocation5 [shape = 'u8[16384]{0}', space=vmem, size = 0x4000, scoped, tag = 'input window, operand 1, single buffered']
    #allocation6 [shape = 's32[1]{0}', space=sflag, size = 0x4, scoped, tag = 'scoped memory for tpu_custom_call.1']
    #allocation7 [shape = 'u8[16384]{0}', space=vmem, size = 0x4000, scoped, tag = 'output window, operand 0, single buffered']
    %7 = vsyncpa [#allocation3], 0
    %8 = vsyncpa [#allocation6], 0
    %9 = vsyncpa [#allocation4], 0
    // Predicated region
    $region2: #{tpu_custom_call.1} parent=1 // pred_check
      _
    $region3: #{tpu_custom_call.1} parent=1 // pred_check_branch
      %11 = sbr.rel (0) target = $region5
    $region4: #{tpu_custom_call.1} parent=1 // pred_region
      %s13 = ssub.s32 512, 512
      %14 = vsyncadd [#allocation3], %s13
      %s16 = sshll.u32 [#allocation2], 4
      %s17 = int_to_ptr.vmem [resolvable:$true] %s16
      %19 = dma.hbm_to_vmem [thread:$0]  %s0, 512, %s17, [#allocation3]
    $region5: #{tpu_custom_call.1} parent=1 // pred_fallthru
      _
    // Predicated region
    $region6: #{tpu_custom_call.1} parent=1 // pred_check
      _
    $region7: #{tpu_custom_call.1} parent=1 // pred_check_branch
      %21 = sbr.rel (0) target = $region9
    $region8: #{tpu_custom_call.1} parent=1 // pred_region
      %s23 = ssub.s32 512, 512
      %24 = vsyncadd [#allocation6], %s23
      %s26 = sshll.u32 [#allocation5], 4
      %s27 = int_to_ptr.vmem [resolvable:$true] %s26
      %29 = dma.hbm_to_vmem [thread:$0]  %s1, 512, %s27, [#allocation6]
    $region9: #{tpu_custom_call.1} parent=1 // pred_fallthru
      _
    // Predicated region
    $region10: #{tpu_custom_call.1} parent=1 // pred_check
      _
    $region11: #{tpu_custom_call.1} parent=1 // pred_check_branch
      %31 = sbr.rel (0) target = $region13
    $region12: #{tpu_custom_call.1} parent=1 // pred_region
      %32 = dma.done [#allocation3], 512
    $region13: #{tpu_custom_call.1} parent=1 // pred_fallthru
      _
    // Predicated region
    $region14: #{tpu_custom_call.1} parent=1 // pred_check
      _
    $region15: #{tpu_custom_call.1} parent=1 // pred_check_branch
      %34 = sbr.rel (0) target = $region17
    $region16: #{tpu_custom_call.1} parent=1 // pred_region
      %35 = dma.done [#allocation6], 512
    $region17: #{tpu_custom_call.1} parent=1 // pred_fallthru
      _
    %v36 = vld [vmem:[#allocation2] sm:$0xff]
    %v37 = vld [vmem:[#allocation2 + $0x8] sm:$0xff]
    %v38 = vld [vmem:[#allocation2 + $0x10] sm:$0xff]
    %v39 = vld [vmem:[#allocation2 + $0x18] sm:$0xff]
    %v40 = vld [vmem:[#allocation5] sm:$0xff]
    %v41 = vld [vmem:[#allocation5 + $0x8] sm:$0xff]
    %v42 = vld [vmem:[#allocation5 + $0x10] sm:$0xff]
    %v43 = vld [vmem:[#allocation5 + $0x18] sm:$0xff]
    %vm44 = vcmp.gt.f32.partialorder %v40, 0.2
    %vm45 = vcmp.gt.f32.partialorder %v41, 0.2
    %vm46 = vcmp.gt.f32.partialorder %v42, 0.2
    %vm47 = vcmp.gt.f32.partialorder %v43, 0.2
    %vm48 = vcmp.lt.f32.partialorder %v40, 0.5
    %vm49 = vcmp.lt.f32.partialorder %v41, 0.5
    %vm50 = vcmp.lt.f32.partialorder %v42, 0.5
    %vm51 = vcmp.lt.f32.partialorder %v43, 0.5
    %vm52 = vmand %vm44, %vm48
    %vm53 = vmand %vm45, %vm49
    %vm54 = vmand %vm46, %vm50
    %vm55 = vmand %vm47, %vm51
    %v56 = vsel %vm52, %v36, 0.0
    %v57 = vsel %vm53, %v37, 0.0
    %v58 = vsel %vm54, %v38, 0.0
    %v59 = vsel %vm55, %v39, 0.0
    %60 = vst [vmem:[#allocation7] sm:$0xff] %v56
    %61 = vst [vmem:[#allocation7 + $0x8] sm:$0xff] %v57
    %62 = vst [vmem:[#allocation7 + $0x10] sm:$0xff] %v58
    %63 = vst [vmem:[#allocation7 + $0x18] sm:$0xff] %v59
    // Predicated region
    $region18: #{tpu_custom_call.1} parent=1 // pred_check
      _
    $region19: #{tpu_custom_call.1} parent=1 // pred_check_branch
      %65 = sbr.rel (0) target = $region21
    $region20: #{tpu_custom_call.1} parent=1 // pred_region
      %s67 = ssub.s32 512, 512
      %68 = vsyncadd [#allocation4], %s67
      %s70 = sshll.u32 [#allocation7], 4
      %s71 = int_to_ptr.vmem [resolvable:$true] %s70
      %73 = dma.vmem_to_hbm [thread:$0]  %s71, 512, %s2, [#allocation4]
    $region21: #{tpu_custom_call.1} parent=1 // pred_fallthru
      _
    // Predicated region
    $region22: #{tpu_custom_call.1} parent=1 // pred_check
      _
    $region23: #{tpu_custom_call.1} parent=1 // pred_check_branch
      %75 = sbr.rel (0) target = $region25
    $region24: #{tpu_custom_call.1} parent=1 // pred_region
      %76 = dma.done [#allocation4], 512
    $region25: #{tpu_custom_call.1} parent=1 // pred_fallthru
      _
    %77 = vsyncpa [#allocation3], 1
    %78 = vsyncpa [#allocation6], 1
    %79 = vsyncpa [#allocation4], 1

</llo_original>
